<compile_context>
chip_gen: v7x
topology: tpu7x:2x2x1
jax: 0.10.0
libtpu: 0.0.40
codegen_flags: <defaults>
</compile_context>

<pallas_src>
import math

import jax
import jax.numpy as jnp
from jax import lax
from jax.experimental import pallas as pl
from jax.experimental.pallas import tpu as pltpu


def make_rope_tables(max_position: int, embedding_size: int):
    """Replicates get_sinusoid_encoding_table + repeat_interleave(2) buffers."""
    pos = jnp.arange(max_position, dtype=jnp.float32)[:, None]            # (P, 1)
    div = jnp.exp(
        jnp.arange(0, embedding_size, 2, dtype=jnp.float32)
        * (-math.log(10000.0) / embedding_size)
    )                                                                     # (D/2,)
    angles = pos * div                                                    # (P, D/2)
    # cos_position[p, 2i] = cos_position[p, 2i+1] = cos(angles[p, i]); same for sin.
    cos_position = jnp.repeat(jnp.cos(angles), 2, axis=-1)                # (P, D)
    sin_position = jnp.repeat(jnp.sin(angles), 2, axis=-1)                # (P, D)
    return cos_position, sin_position


def rope_kernel(q_ref, cos_ref, sin_ref, o_ref):
    # q block: (1, S_T, Df); table blocks: (S_T, Df).  Df is always a multiple
    # of 128, so loads/stores are lane-dense (unmasked vst).
    x = q_ref[0].astype(jnp.float32)                      # (S_T, Df)
    cos = cos_ref[...].astype(jnp.float32)
    sin_signed = sin_ref[...].astype(jnp.float32)         # -sin even lanes, +sin odd
    d = x.shape[-1]

    # Pairwise rotate via two XLU lane rotations (XLU slot, free vs VALU/DMA).
    x_next = pltpu.roll(x, shift=d - 1, axis=1)           # x_next[:, i] = x[:, (i+1) % d]
    x_prev = pltpu.roll(x, shift=1, axis=1)               # x_prev[:, i] = x[:, (i-1) % d]

    # Parity select replaces the second sin table.  Even lanes take x_next
    # (paired with -sin), odd lanes take x_prev (paired with +sin); the roll
    # wrap-around lanes (Df-1 for x_next, 0 for x_prev) are never selected, so
    # fused-row boundaries stay uncontaminated.
    parity = lax.broadcasted_iota(jnp.int32, x.shape, 1) & 1
    swapped = jnp.where(parity == 0, x_next, x_prev)

    out = x * cos + swapped * sin_signed
    o_ref[0] = out.astype(o_ref.dtype)


def _choose_seq_tile(s_total: int, lane_dim: int, itemsize: int,
                     target_bytes: int) -> int:
    """Largest tile (fused rows) that divides s_total, is a multiple of the
    dtype's min sublane count, and keeps one block under target_bytes.
    Falls back to the full extent (always correct)."""
    sub = max(8, 32 // itemsize)          # f32 -> 8, bf16 -> 16, int8/fp8 -> 32
    max_rows = max(1, target_bytes // (lane_dim * itemsize))
    if s_total <= max_rows:
        return s_total
    t = (max_rows // sub) * sub
    while t >= sub:
        if s_total % t == 0:
            return t
        t -= sub
    return s_total


def rope_pallas(qw, cos_position, sin_position, *, target_block_bytes=2 << 20):
    B, S, D = qw.shape
    assert D % 2 == 0, "RoPE requires an even embedding size"
    assert S <= cos_position.shape[0], (
        f"seq_len {S} exceeds max_position {cos_position.shape[0]}")
    assert cos_position.shape[1] == D and sin_position.shape[1] == D

    # Table prep in plain JAX (tiny, runs once per call under jit).
    # Signed-sin table folds both the sign flip and the parity masking of the
    # original two-table scheme into a single stream.
    cos_s = cos_position[:S].astype(jnp.float32)                          # (S, D)
    sin_s = sin_position[:S].astype(jnp.float32)                          # (S, D)
    lane_parity = jnp.arange(D, dtype=jnp.int32) % 2
    sin_signed = jnp.where(lane_parity == 0, -sin_s, sin_s)               # (S, D)

    # Lane fusion: fold k sequence positions into the lane axis so the last
    # dim is a multiple of 128.  Pad S up to a multiple of k if needed so the
    # output stays lane-dense (padding rows are zero and sliced off).
    if D % 128 == 0:
        k = 1
    else:
        k = math.lcm(D, 128) // D
    S_pad = ((S + k - 1) // k) * k
    if S_pad != S:
        pad = S_pad - S
        qw_p = jnp.pad(qw, ((0, 0), (0, pad), (0, 0)))
        cos_p = jnp.pad(cos_s, ((0, pad), (0, 0)))
        sin_p = jnp.pad(sin_signed, ((0, pad), (0, 0)))
    else:
        qw_p, cos_p, sin_p = qw, cos_s, sin_signed

    Sf, Df = S_pad // k, k * D
    qf = qw_p.reshape(B, Sf, Df)
    cosf = cos_p.reshape(Sf, Df)
    sinf = sin_p.reshape(Sf, Df)

    itemsize = jnp.dtype(qw.dtype).itemsize
    s_tile = _choose_seq_tile(Sf, Df, itemsize, target_block_bytes)
    grid = (Sf // s_tile, B)   # batch innermost: cos/sin tiles reused across batch

    out = pl.pallas_call(
        rope_kernel,
        out_shape=jax.ShapeDtypeStruct((B, Sf, Df), qw.dtype),
        grid=grid,
        in_specs=[
            pl.BlockSpec((1, s_tile, Df), lambda s, b: (b, s, 0)),
            pl.BlockSpec((s_tile, Df), lambda s, b: (s, 0)),
            pl.BlockSpec((s_tile, Df), lambda s, b: (s, 0)),
        ],
        out_specs=pl.BlockSpec((1, s_tile, Df), lambda s, b: (b, s, 0)),
        compiler_params=pltpu.CompilerParams(
            # seq axis "parallel": on v7x the megacore split lands on seq, so
            # the two TensorCores stream disjoint table halves instead of
            # duplicating them; batch axis "arbitrary" preserves in-core
            # cos/sin reuse across the batch.
            dimension_semantics=("parallel", "arbitrary"),
            vmem_limit_bytes=32 * 1024 * 1024,
        ),
    )(qf, cosf, sinf)

    out = out.reshape(B, S_pad, D)
    if S_pad != S:
        out = out[:, :S, :]
    return out


def rope_reference(qw, cos_position, sin_position):
    """Pure-JAX mirror of the PyTorch forward, for correctness checking."""
    seq_len = qw.shape[1]
    q_even = qw[..., 0::2]
    q_odd = qw[..., 1::2]
    qw2 = jnp.stack([-q_odd, q_even], axis=-1).reshape(qw.shape)
    return qw * cos_position[:seq_len] + qw2 * sin_position[:seq_len]


if __name__ == "__main__":
    MAX_POSITION = 64
    D = 32
    cos_position, sin_position = make_rope_tables(MAX_POSITION, D)

    # Case 1: basic shapes (B=2, S=16, D=32); k=4 lane fusion, single S-tile.
    q1 = jax.random.normal(jax.random.PRNGKey(0), (2, 16, D), dtype=jnp.float32)
    out1 = jax.block_until_ready(rope_pallas(q1, cos_position, sin_position))
    ref1 = rope_reference(q1, cos_position, sin_position)
    assert out1.shape == ref1.shape and out1.dtype == ref1.dtype
    assert jnp.allclose(out1, ref1, atol=1e-5, rtol=1e-5), "case 1 mismatch"

    # Case 2: S not divisible by the fused-row count k -> padding path.
    q2 = jax.random.normal(jax.random.PRNGKey(0), (2, 10, D), dtype=jnp.float32)
    out2 = jax.block_until_ready(rope_pallas(q2, cos_position, sin_position))
    ref2 = rope_reference(q2, cos_position, sin_position)
    assert out2.shape == ref2.shape
    assert jnp.allclose(out2, ref2, atol=1e-5, rtol=1e-5), "case 2 mismatch"

    # Case 3: multiple sequence tiles crossing S-tile boundaries with k > 1
    # (small target_block_bytes forces tiling at these toy shapes).
    q3 = jax.random.normal(jax.random.PRNGKey(0), (2, 64, D), dtype=jnp.float32)
    out3 = jax.block_until_ready(
        rope_pallas(q3, cos_position, sin_position, target_block_bytes=4096))
    ref3 = rope_reference(q3, cos_position, sin_position)
    assert jnp.allclose(out3, ref3, atol=1e-5, rtol=1e-5), "case 3 mismatch"

    print("KERNEL_OK")
</pallas_src>

<mosaic_0001>
module attributes {stable_mosaic.version = 11 : i64} {
  func.func @rope_kernel(%arg0: i32, %arg1: i32, %arg2: memref<1x4x128xf32, #tpu.memory_space<vmem>>, %arg3: memref<4x128xf32, #tpu.memory_space<vmem>>, %arg4: memref<4x128xf32, #tpu.memory_space<vmem>>, %arg5: memref<1x4x128xf32, #tpu.memory_space<vmem>>) attributes {dimension_semantics = [#tpu.dimension_semantics<parallel>, #tpu.dimension_semantics<arbitrary>], iteration_bounds = array<i64: 1, 2>, scalar_prefetch = 0 : i64, scratch_operands = 0 : i64, tpu.core_type = #tpu.core_type<tc>, window_params = [{transform_indices = @transform_0, window_bounds = array<i64: 1, 4, 128>}, {transform_indices = @transform_1, window_bounds = array<i64: 4, 128>}, {transform_indices = @transform_2, window_bounds = array<i64: 4, 128>}, {transform_indices = @transform_3, window_bounds = array<i64: 1, 4, 128>}]} {
    %c0 = arith.constant 0 : index
    %c0_0 = arith.constant 0 : index
    %c0_1 = arith.constant 0 : index
    %0 = vector.load %arg2[%c0, %c0_0, %c0_1] : memref<1x4x128xf32, #tpu.memory_space<vmem>>, vector<1x4x128xf32>
    %1 = vector.shape_cast %0 : vector<1x4x128xf32> to vector<4x128xf32>
    %c0_2 = arith.constant 0 : index
    %c0_3 = arith.constant 0 : index
    %2 = vector.load %arg3[%c0_2, %c0_3] : memref<4x128xf32, #tpu.memory_space<vmem>>, vector<4x128xf32>
    %c0_4 = arith.constant 0 : index
    %c0_5 = arith.constant 0 : index
    %3 = vector.load %arg4[%c0_4, %c0_5] : memref<4x128xf32, #tpu.memory_space<vmem>>, vector<4x128xf32>
    %c127_i32 = arith.constant 127 : i32
    %4 = tpu.dynamic_rotate %1 by %c127_i32 dim 1 : vector<4x128xf32>, i32 -> vector<4x128xf32>
    %c1_i32 = arith.constant 1 : i32
    %5 = tpu.dynamic_rotate %1 by %c1_i32 dim 1 : vector<4x128xf32>, i32 -> vector<4x128xf32>
    %6 = tpu.iota {dimensions = array<i32: 1>} : vector<4x128xi32>
    %c1_i32_6 = arith.constant 1 : i32
    %7 = vector.broadcast %c1_i32_6 : i32 to vector<4x128xi32>
    %8 = arith.andi %6, %7 : vector<4x128xi32>
    %c0_i32 = arith.constant 0 : i32
    %9 = vector.broadcast %c0_i32 : i32 to vector<4x128xi32>
    %10 = arith.cmpi eq, %8, %9 : vector<4x128xi32>
    %11 = arith.select %10, %4, %5 : vector<4x128xi1>, vector<4x128xf32>
    %12 = arith.mulf %1, %2 : vector<4x128xf32>
    %13 = arith.mulf %11, %3 : vector<4x128xf32>
    %14 = arith.addf %12, %13 : vector<4x128xf32>
    %c0_7 = arith.constant 0 : index
    %c0_8 = arith.constant 0 : index
    %c0_9 = arith.constant 0 : index
    %15 = vector.load %arg5[%c0_7, %c0_8, %c0_9] : memref<1x4x128xf32, #tpu.memory_space<vmem>>, vector<1x4x128xf32>
    %16 = vector.shape_cast %15 : vector<1x4x128xf32> to vector<4x128xf32>
    %17 = vector.shape_cast %14 : vector<4x128xf32> to vector<1x4x128xf32>
    tpu.vector_store %arg5[%c0_7, %c0_8, %c0_9], %17 {strides = array<i32>} : memref<1x4x128xf32, #tpu.memory_space<vmem>>, vector<1x4x128xf32>,
    return
  }
  func.func @transform_0(%arg0: i32, %arg1: i32) -> (i32, i32, i32) {
    %c0_i32 = arith.constant 0 : i32
    %c0_i32_0 = arith.constant 0 : i32
    return %arg1, %arg0, %c0_i32 : i32, i32, i32
  }
  func.func @transform_1(%arg0: i32, %arg1: i32) -> (i32, i32) {
    %c0_i32 = arith.constant 0 : i32
    %c0_i32_0 = arith.constant 0 : i32
    return %arg0, %c0_i32 : i32, i32
  }
  func.func @transform_2(%arg0: i32, %arg1: i32) -> (i32, i32) {
    %c0_i32 = arith.constant 0 : i32
    %c0_i32_0 = arith.constant 0 : i32
    return %arg0, %c0_i32 : i32, i32
  }
  func.func @transform_3(%arg0: i32, %arg1: i32) -> (i32, i32, i32) {
    %c0_i32 = arith.constant 0 : i32
    %c0_i32_0 = arith.constant 0 : i32
    return %arg1, %arg0, %c0_i32 : i32, i32, i32
  }
}

</mosaic_0001>

<llo_original>
// kernel: tpu_custom_call.1
$region0: #{tpu_custom_call.1}
  #allocation0 [shape = 'u32[]', space=smem, size = 0x4, offset = 0x4, fixed_abs, tag = 'smem constant byte address 0x4 - core index']
  #allocation1 [shape = 'u32[144,128]{1,0:T(1,128)}', space=vmem, size = 0x12000, scoped, tag = 'internal scratch']
  %s0 = inlined_call_operand.hbm [shape: f32[2,4,128], index: 0, kind: input, shape index: {}]
  %s1 = inlined_call_operand.hbm [shape: f32[4,128], index: 1, kind: input, shape index: {}]
  %s2 = inlined_call_operand.vmem [shape: f32[4,128], index: 2, kind: input, shape index: {}]
  %s3 = inlined_call_operand.hbm [shape: f32[2,4,128], index: 3, kind: output, shape index: {}]
  %s4 = sld [smem:[#allocation0]]
  $region53: #{tpu_custom_call.1} parent=0
    _
  %s6 = ssub.s32 1, %s4
  %s7 = scalar_select 0, %s6, %s4
  $region1: #{tpu_custom_call.1} parent=0
    #allocation2 [shape = 'u8[4096]{0}', space=vmem, size = 0x1000, scoped, tag = 'input window, operand 0']
    #allocation3 [shape = 's32[2]{0}', space=sflag, size = 0x8, scoped, tag = 'scoped memory for tpu_custom_call.1']
    #allocation4 [shape = 's32[2]{0}', space=sflag, size = 0x8, scoped, tag = 'scoped memory for tpu_custom_call.1']
    #allocation5 [shape = 'u8[2048]{0}', space=vmem, size = 0x800, scoped, tag = 'input window, operand 1, single buffered']
    #allocation6 [shape = 's32[1]{0}', space=sflag, size = 0x4, scoped, tag = 'scoped memory for tpu_custom_call.1']
    #allocation7 [shape = 'u8[4096]{0}', space=vmem, size = 0x1000, scoped, tag = 'output window, operand 0']
    %8 = vsyncpa [#allocation3], 0
    %s9 = scalar_lea.sflag [#allocation3], 1
    %10 = vsyncpa %s9, 0
    %11 = vsyncpa [#allocation6], 0
    %12 = vsyncpa [#allocation4], 0
    %s13 = scalar_lea.sflag [#allocation4], 1
    %14 = vsyncpa %s13, 0
    loop: start=0, step=1, limit=4
    $region2: #{tpu_custom_call.1} parent=1 // loop_pre_header
      _
    $region3: #{tpu_custom_call.1} parent=1 // loop_header
      %s16 = sphi 0, %s20
      %p17 = scmp.ge.s32.totalorder %s16, 4
      %s23 = sphi 0, %s35
      %s24 = sphi 0, %s31
      %s25 = sphi 0, %s23
      %s26 = sphi 0, %s24
      %s27 = sphi 0, %s25
      %s28 = sphi 0, %s26
      %s40 = sphi 0, %s42
      %s43 = sphi 0, %s40
      %s44 = sphi 0, %s43
      %s60 = sphi 0, %s44
      %s66 = sphi 0, %s68
      %s69 = sphi 0, %s66
      %s70 = sphi 0, %s69
      %s86 = sphi 0, %s70
      %s92 = sphi 0, %s94
      %s95 = sphi 0, %s92
      %s96 = sphi 0, %s95
      %s112 = sphi 0, %s96
      %s120 = sphi 0, %s122
      %s123 = sphi 0, %s120
      %s124 = sphi 0, %s123
      %s140 = sphi 0, %s124
    $region4: #{tpu_custom_call.1} parent=1 // loop_header_branch
      %19 = sbr.rel (%p17) target = $region8
    $region5: #{tpu_custom_call.1} parent=1 // loop_body
      %s21 = ssub.s32 %s16, 1
      %s22 = ssub.s32 %s16, 2
      %s29 = sadd.s32 1, %s24
      %p30 = scmp.ge.s32.totalorder %s29, 2
      %s31 = scalar_select %p30, 0, %s29
      %s32 = sadd.s32 1, %s23
      %s33 = scalar_select %p30, %s32, %s23
      %p34 = scmp.ge.s32.totalorder %s33, 1
      %s35 = scalar_select %p34, 0, %s33
      %s36 = ssub.s32 %s24, %s31
      %s37 = ssub.s32 %s23, %s35
      %s38 = sor.u32 %s36, %s37
      %p39 = scmp.eq.s32.totalorder %s38, 0
      %s41 = sadd.s32 %s40, 1
      %s42 = scalar_select %p39, %s40, %s41
      %p45 = pneg %p39
      %p46 = scmp.eq.s32.totalorder %s16, 1
      %p47 = por %p45, %p46
      %p48 = scmp.ne.s32.totalorder %s40, %s43
      %p49 = scmp.eq.s32.totalorder %s16, 0
      %p50 = por %p48, %p49
      %p51 = scmp.ne.s32.totalorder %s40, %s43
      %p52 = scmp.eq.s32.totalorder %s21, 1
      %p53 = por %p51, %p52
      %p54 = scmp.ne.s32.totalorder %s43, %s44
      %p55 = scmp.eq.s32.totalorder %s21, 0
      %p56 = por %p54, %p55
      %p57 = scmp.ne.s32.totalorder %s43, %s44
      %p58 = scmp.eq.s32.totalorder %s22, 1
      %p59 = por %p57, %p58
      %p61 = scmp.ne.s32.totalorder %s44, %s60
      %p62 = scmp.eq.s32.totalorder %s22, 0
      %p63 = por %p61, %p62
      %s64 = ssub.s32 %s23, %s35
      %p65 = scmp.eq.s32.totalorder %s64, 0
      %s67 = sadd.s32 %s66, 1
      %s68 = scalar_select %p65, %s66, %s67
      %p71 = pneg %p65
      %p72 = scmp.eq.s32.totalorder %s16, 1
      %p73 = por %p71, %p72
      %p74 = scmp.ne.s32.totalorder %s66, %s69
      %p75 = scmp.eq.s32.totalorder %s16, 0
      %p76 = por %p74, %p75
      %p77 = scmp.ne.s32.totalorder %s66, %s69
      %p78 = scmp.eq.s32.totalorder %s21, 1
      %p79 = por %p77, %p78
      %p80 = scmp.ne.s32.totalorder %s69, %s70
      %p81 = scmp.eq.s32.totalorder %s21, 0
      %p82 = por %p80, %p81
      %p83 = scmp.ne.s32.totalorder %s69, %s70
      %p84 = scmp.eq.s32.totalorder %s22, 1
      %p85 = por %p83, %p84
      %p87 = scmp.ne.s32.totalorder %s70, %s86
      %p88 = scmp.eq.s32.totalorder %s22, 0
      %p89 = por %p87, %p88
      %s90 = ssub.s32 %s23, %s35
      %p91 = scmp.eq.s32.totalorder %s90, 0
      %s93 = sadd.s32 %s92, 1
      %s94 = scalar_select %p91, %s92, %s93
      %p97 = pneg %p91
      %p98 = scmp.eq.s32.totalorder %s16, 1
      %p99 = por %p97, %p98
      %p100 = scmp.ne.s32.totalorder %s92, %s95
      %p101 = scmp.eq.s32.totalorder %s16, 0
      %p102 = por %p100, %p101
      %p103 = scmp.ne.s32.totalorder %s92, %s95
      %p104 = scmp.eq.s32.totalorder %s21, 1
      %p105 = por %p103, %p104
      %p106 = scmp.ne.s32.totalorder %s95, %s96
      %p107 = scmp.eq.s32.totalorder %s21, 0
      %p108 = por %p106, %p107
      %p109 = scmp.ne.s32.totalorder %s95, %s96
      %p110 = scmp.eq.s32.totalorder %s22, 1
      %p111 = por %p109, %p110
      %p113 = scmp.ne.s32.totalorder %s96, %s112
      %p114 = scmp.eq.s32.totalorder %s22, 0
      %p115 = por %p113, %p114
      %s116 = ssub.s32 %s24, %s31
      %s117 = ssub.s32 %s23, %s35
      %s118 = sor.u32 %s116, %s117
      %p119 = scmp.eq.s32.totalorder %s118, 0
      %s121 = sadd.s32 %s120, 1
      %s122 = scalar_select %p119, %s120, %s121
      %p125 = pneg %p119
      %p126 = scmp.eq.s32.totalorder %s16, 1
      %p127 = por %p125, %p126
      %p128 = scmp.ne.s32.totalorder %s120, %s123
      %p129 = scmp.eq.s32.totalorder %s16, 0
      %p130 = por %p128, %p129
      %p131 = scmp.ne.s32.totalorder %s120, %s123
      %p132 = scmp.eq.s32.totalorder %s21, 1
      %p133 = por %p131, %p132
      %p134 = scmp.ne.s32.totalorder %s123, %s124
      %p135 = scmp.eq.s32.totalorder %s21, 0
      %p136 = por %p134, %p135
      %p137 = scmp.ne.s32.totalorder %s123, %s124
      %p138 = scmp.eq.s32.totalorder %s22, 1
      %p139 = por %p137, %p138
      %p141 = scmp.ne.s32.totalorder %s124, %s140
      %p142 = scmp.eq.s32.totalorder %s22, 0
      %p143 = por %p141, %p142
      %p144 = scmp.le.s32.totalorder 1, %s16
      %p145 = scmp.lt.s32.totalorder %s16, 3
      %p146 = pnand %p144, %p145
      %p147 = pneg %p146
      // Predicated region
      $region9: #{tpu_custom_call.1} parent=5 // pred_check
        _
      $region10: #{tpu_custom_call.1} parent=5 // pred_check_branch
        %149 = sbr.rel (%p146) target = $region12
      $region11: #{tpu_custom_call.1} parent=5 // pred_region
        %s150 = ssub.s32 %s16, 1
        // Predicated region
        $region13: #{tpu_custom_call.1} parent=11 // pred_check
          %p151 = pneg %p82
        $region14: #{tpu_custom_call.1} parent=11 // pred_check_branch
          %153 = sbr.rel (%p151) target = $region16
        $region15: #{tpu_custom_call.1} parent=11 // pred_region
          %s155 = ssub.s32 64, 64
          %156 = vsyncadd [#allocation6], %s155
          %s157 = smul.addr %s25, 64
          %s158 = scalar_lea.hbm %s1, %s157
          %s160 = sshll.u32 [#allocation5], 4
          %s161 = int_to_ptr.vmem [resolvable:$true] %s160
          %163 = dma.hbm_to_vmem [thread:$0]  %s158, 64, %s161, [#allocation6]
        $region16: #{tpu_custom_call.1} parent=11 // pred_fallthru
          _
        // Predicated region
        $region17: #{tpu_custom_call.1} parent=11 // pred_check
          %p164 = pneg %p108
        $region18: #{tpu_custom_call.1} parent=11 // pred_check_branch
          %166 = sbr.rel (%p164) target = $region20
        $region19: #{tpu_custom_call.1} parent=11 // pred_region
          %p167 = scmp.lt.s32.totalorder %s25, 0
          %s168 = scalar_select %p167, %s25, 0
          %s169 = smul.addr %s168, 4
          %s170 = scalar_lea.vmem %s2, %s169
        $region20: #{tpu_custom_call.1} parent=11 // pred_fallthru
          _
      $region12: #{tpu_custom_call.1} parent=5 // pred_fallthru
        _
      %p171 = scmp.lt.s32.totalorder %s16, 2
      // Predicated region
      $region21: #{tpu_custom_call.1} parent=5 // pred_check
        %p172 = pneg %p171
      $region22: #{tpu_custom_call.1} parent=5 // pred_check_branch
        %174 = sbr.rel (%p172) target = $region24
      $region23: #{tpu_custom_call.1} parent=5 // pred_region
        // Predicated region
        $region25: #{tpu_custom_call.1} parent=23 // pred_check
          %p175 = pneg %p50
        $region26: #{tpu_custom_call.1} parent=23 // pred_check_branch
          %177 = sbr.rel (%p175) target = $region28
        $region27: #{tpu_custom_call.1} parent=23 // pred_region
          %s178 = sand.u32 %s40, 1
          %s179 = scalar_lea.sflag [#allocation3], %s178
          %s180 = sand.u32 %s40, 1
          %s181 = smul.addr %s180, 4
          %s182 = scalar_lea.vmem [#allocation2], %s181
          %s184 = ssub.s32 64, 64
          %185 = vsyncadd %s179, %s184
          %s186 = sadd.s32 %s23, %s24
          %s187 = smul.addr %s186, 64
          %s188 = scalar_lea.hbm %s0, %s187
          %s190 = sshll.u32 %s182, 4
          %s191 = int_to_ptr.vmem [resolvable:$true] %s190
          %193 = dma.hbm_to_vmem [thread:$0]  %s188, 64, %s191, %s179
        $region28: #{tpu_custom_call.1} parent=23 // pred_fallthru
          _
      $region24: #{tpu_custom_call.1} parent=5 // pred_fallthru
        _
      %p194 = scmp.le.s32.totalorder 1, %s16
      %p195 = scmp.lt.s32.totalorder %s16, 3
      %p196 = pnand %p194, %p195
      %p197 = pneg %p196
      // Predicated region
      $region29: #{tpu_custom_call.1} parent=5 // pred_check
        _
      $region30: #{tpu_custom_call.1} parent=5 // pred_check_branch
        %199 = sbr.rel (%p196) target = $region32
      $region31: #{tpu_custom_call.1} parent=5 // pred_region
        %s200 = ssub.s32 %s16, 1
        %s201 = sand.u32 %s43, 1
        %s202 = scalar_lea.sflag [#allocation3], %s201
        %s203 = sand.u32 %s43, 1
        %s204 = smul.addr %s203, 4
        %s205 = scalar_lea.vmem [#allocation2], %s204
        // Predicated region
        $region33: #{tpu_custom_call.1} parent=31 // pred_check
          %p206 = pneg %p56
        $region34: #{tpu_custom_call.1} parent=31 // pred_check_branch
          %208 = sbr.rel (%p206) target = $region36
        $region35: #{tpu_custom_call.1} parent=31 // pred_region
          %209 = dma.done %s202, 64
        $region36: #{tpu_custom_call.1} parent=31 // pred_fallthru
          _
        // Predicated region
        $region37: #{tpu_custom_call.1} parent=31 // pred_check
          %p210 = pneg %p82
        $region38: #{tpu_custom_call.1} parent=31 // pred_check_branch
          %212 = sbr.rel (%p210) target = $region40
        $region39: #{tpu_custom_call.1} parent=31 // pred_region
          %213 = dma.done [#allocation6], 64
        $region40: #{tpu_custom_call.1} parent=31 // pred_fallthru
          _
        %s214 = sand.u32 %s43, 1
        %s215 = scalar_lea.sflag [#allocation3], %s214
        %s216 = sand.u32 %s43, 1
        %s217 = smul.addr %s216, 4
        %s218 = scalar_lea.vmem [#allocation2], %s217
        %p219 = pneg %p56
        %p220 = pneg %p53
        %p221 = pneg %p82
        %p222 = pneg %p79
        %p223 = scmp.lt.s32.totalorder %s25, 0
        %s224 = scalar_select %p223, %s25, 0
        %s225 = smul.addr %s224, 4
        %s226 = scalar_lea.vmem %s2, %s225
        %p227 = pneg %p108
        %p228 = pneg %p105
        %p229 = pneg %p136
        %p230 = pneg %p133
        %s231 = sand.u32 %s123, 1
        %s232 = scalar_lea.sflag [#allocation4], %s231
        %s233 = sand.u32 %s123, 1
        %s234 = smul.addr %s233, 4
        %s235 = scalar_lea.vmem [#allocation7], %s234
        %p236 = scmp.lt.s32.totalorder %s25, 0
        %s237 = scalar_select %p236, %s25, 0
        %s238 = smul.addr %s237, 4
        %s239 = scalar_lea.vmem %s2, %s238
        %v240 = vld [vmem:[%s205] sm:$0xf]
        %v241 = vld [vmem:[#allocation5] sm:$0xf]
        %v242 = vld [vmem:[%s239] sm:$0xf]
        %243 = vrot.lane.b32.xlu0 %v240, 127
        %v244 = vpop.permute.xlu0 %243
        %245 = vrot.lane.b32.xlu0 %v240, 1
        %v246 = vpop.permute.xlu0 %245
        %v247 = vlaneseq
        %v248 = vand.u32 %v247, 127
        %v249 = vand.u32 %v248, 1
        %vm250 = vcmp.eq.s32.totalorder %v249, 0
        %v251 = vsel %vm250, %v244, %v246
        %v252 = vmul.f32 %v240, %v241
        %v253 = vmul.f32 %v251, %v242
        %v254 = vadd.f32 %v252, %v253
        %255 = vst [vmem:[%s235] sm:$0xf] %v254
        %s256 = sand.u32 %s123, 1
        %s257 = scalar_lea.sflag [#allocation4], %s256
        %s258 = sand.u32 %s123, 1
        %s259 = smul.addr %s258, 4
        %s260 = scalar_lea.vmem [#allocation7], %s259
        // Predicated region
        $region41: #{tpu_custom_call.1} parent=31 // pred_check
          %p261 = pneg %p133
        $region42: #{tpu_custom_call.1} parent=31 // pred_check_branch
          %263 = sbr.rel (%p261) target = $region44
        $region43: #{tpu_custom_call.1} parent=31 // pred_region
          %s265 = ssub.s32 64, 64
          %266 = vsyncadd %s257, %s265
          %s267 = sadd.s32 %s25, %s26
          %s268 = smul.addr %s267, 64
          %s269 = scalar_lea.hbm %s3, %s268
          %s271 = sshll.u32 %s260, 4
          %s272 = int_to_ptr.vmem [resolvable:$true] %s271
          %274 = dma.vmem_to_hbm [thread:$0]  %s272, 64, %s269, %s257
        $region44: #{tpu_custom_call.1} parent=31 // pred_fallthru
          _
      $region32: #{tpu_custom_call.1} parent=5 // pred_fallthru
        _
      %p275 = scmp.le.s32.totalorder 2, %s16
      // Predicated region
      $region45: #{tpu_custom_call.1} parent=5 // pred_check
        %p276 = pneg %p275
      $region46: #{tpu_custom_call.1} parent=5 // pred_check_branch
        %278 = sbr.rel (%p276) target = $region48
      $region47: #{tpu_custom_call.1} parent=5 // pred_region
        %s279 = ssub.s32 %s16, 2
        // Predicated region
        $region49: #{tpu_custom_call.1} parent=47 // pred_check
          %p280 = pneg %p139
        $region50: #{tpu_custom_call.1} parent=47 // pred_check_branch
          %282 = sbr.rel (%p280) target = $region52
        $region51: #{tpu_custom_call.1} parent=47 // pred_region
          %s283 = sand.u32 %s124, 1
          %s284 = scalar_lea.sflag [#allocation4], %s283
          %s285 = sand.u32 %s124, 1
          %s286 = smul.addr %s285, 4
          %s287 = scalar_lea.vmem [#allocation7], %s286
          %288 = dma.done %s284, 64
        $region52: #{tpu_custom_call.1} parent=47 // pred_fallthru
          _
      $region48: #{tpu_custom_call.1} parent=5 // pred_fallthru
        _
    $region6: #{tpu_custom_call.1} parent=1 // loop_footer
      %s20 = sadd.s32 1, %s16
    $region7: #{tpu_custom_call.1} parent=1 // loop_footer_branch
      %15 = sbr.rel target = $region3
    $region8: #{tpu_custom_call.1} parent=1 // loop_exit
      _
    %289 = vsyncpa [#allocation3], 1
    %s290 = scalar_lea.sflag [#allocation3], 1
    %291 = vsyncpa %s290, 1
    %292 = vsyncpa [#allocation6], 1
    %293 = vsyncpa [#allocation4], 1
    %s294 = scalar_lea.sflag [#allocation4], 1
    %295 = vsyncpa %s294, 1

</llo_original>
